<compile_context>
chip_gen: v5e
topology: v5e:2x2
jax: 0.10.0
libtpu: 0.0.40
codegen_flags: <defaults>
</compile_context>

<pallas_src>
import math

import numpy as np

import jax
import jax.numpy as jnp
from jax.experimental import pallas as pl
from jax.experimental.pallas import tpu as pltpu


# --------------------------------------------------------------------------- #
# Kernel                                                                      #
# --------------------------------------------------------------------------- #
def _make_kernel(tv, with_scores, gather_in_kernel):
    """Build the (TM, TV)-tile kernel for the requested output configuration."""

    def kernel(*refs):
        it = iter(refs)
        # ---- inputs ----
        x_ref = next(it)                                   # (TM, D)
        w_ref = next(it)                                   # (TV, D)  nn.Linear layout
        b_ref = next(it)                                   # (1, TV)
        y_ref = next(it) if gather_in_kernel else None     # (TM, 1) int32
        # ---- outputs ----
        scores_ref = next(it) if with_scores else None     # (TM, TV)
        loss_ref = next(it)                                # (TM, 1) f32: rowloss or lse
        # ---- scratch ----
        m_sc = next(it)                                    # (TM, 1) running max
        l_sc = next(it)                                    # (TM, 1) running sum exp
        t_sc = next(it) if gather_in_kernel else None      # (TM, 1) target score

        j = pl.program_id(1)
        n_v = pl.num_programs(1)

        @pl.when(j == 0)
        def _():
            m_sc[...] = jnp.full_like(m_sc, -jnp.inf)
            l_sc[...] = jnp.zeros_like(l_sc)
            if gather_in_kernel:
                t_sc[...] = jnp.zeros_like(t_sc)

        # ---- projection: s = x @ w_tile^T + b_tile (MXU, f32 accumulate) ----
        x = x_ref[...]
        w = w_ref[...]
        if w.dtype != x.dtype:
            # e.g. fp8 / bf16 weights streamed from HBM, upcast once in VMEM.
            w = w.astype(x.dtype)
        s = jax.lax.dot_general(
            x, w,
            dimension_numbers=(((1,), (1,)), ((), ())),     # contract D of both
            preferred_element_type=jnp.float32,
        ) + b_ref[...].astype(jnp.float32)                  # (TM, TV) f32

        if with_scores:
            scores_ref[...] = s.astype(scores_ref.dtype)    # lane-dense writeback

        # ---- online logsumexp over the V axis ----
        m_prev = m_sc[...]
        m_new = jnp.maximum(m_prev, jnp.max(s, axis=-1, keepdims=True))
        alpha = jnp.exp(m_prev - m_new)                     # exp(-inf)=0 at j==0
        l_sc[...] = alpha * l_sc[...] + jnp.sum(jnp.exp(s - m_new), axis=-1,
                                                keepdims=True)
        m_sc[...] = m_new

        # ---- optional in-kernel target gather (f32 precision) ----
        if gather_in_kernel:
            col = jax.lax.broadcasted_iota(jnp.int32, s.shape, 1) + j * tv
            t_sc[...] += jnp.sum(jnp.where(col == y_ref[...], s, 0.0),
                                 axis=-1, keepdims=True)

        # ---- finalize per-row result ----
        @pl.when(j == n_v - 1)
        def _():
            lse = m_sc[...] + jnp.log(l_sc[...])
            if gather_in_kernel:
                loss_ref[...] = lse - t_sc[...]             # per-row CE loss
            else:
                loss_ref[...] = lse                         # wrapper gathers target

    return kernel


# --------------------------------------------------------------------------- #
# Tile / VMEM heuristics                                                      #
# --------------------------------------------------------------------------- #
def _device_vmem_info():
    """(physical VMEM bytes, generation tag) for the default device."""
    try:
        kind = jax.devices()[0].device_kind.lower()
    except Exception:
        kind = ""
    mib = 1024 * 1024
    if "v7" in kind:
        return 64 * mib, "v7x"
    if "v6" in kind:
        return 128 * mib, "v6e"
    if "v5e" in kind or ("v5" in kind and "lite" in kind):
        return 128 * mib, "v5e"
    if "v5p" in kind or "v4" in kind:
        return 128 * mib, "v6e"
    if "v3" in kind or "v2" in kind:
        return 16 * mib, "v5e"          # small-VMEM fallback: conservative tiles
    return 128 * mib, "v6e"


def _pick_tile(total, cap, align):
    """Largest t <= cap dividing `total`, multiple of `align` (or full extent)."""
    if total <= cap:
        return total
    t = (min(cap, total) // align) * align
    while t >= align:
        if total % t == 0:
            return t
        t -= align
    # TODO(synk): pad ragged N / V to the tile grid instead of falling back to
    # a single full-extent tile.
    return total


def _default_tiles(N, V, D, gen, x_it, w_it, s_it, with_scores, phys_vmem):
    """Per-generation, D-aware TM / TV defaults + sublane alignment for TM."""
    min_it = min(x_it, s_it) if with_scores else x_it
    align_m = max(8, 8 * (4 // max(1, min_it)))     # 8 f32, 16 bf16, 32 int8/fp8
    budget = int(phys_vmem * 0.6)

    tv_cap = 1024 if gen == "v5e" else 2048
    # keep the double-buffered (TV, D) weight tile under ~1/3 of the budget
    tv_cap = min(tv_cap, max(128, ((budget // 3) // max(1, 2 * D * w_it))
                             // 128 * 128))
    tm_cap = 256 if gen == "v5e" else 512
    # per-row bytes: x tile + f32 logits/exp temps + (optional) scores tile
    per_row = 2 * D * x_it + tv_cap * (3 * 4 + (2 * s_it if with_scores else 0))
    tm_cap = min(tm_cap, max(align_m, ((budget // 2) // max(1, per_row))
                             // align_m * align_m))

    tm = _pick_tile(N, tm_cap, align_m)
    tv = _pick_tile(V, tv_cap, 128)

    # v7x megacore: prefer an even number of row blocks so both TCs get work.
    if gen == "v7x" and tm < N and (N // tm) % 2 == 1:
        half = tm // 2
        if half >= align_m and half % align_m == 0 and N % half == 0:
            tm = half
    return tm, tv, align_m


def _weight_spec(tv, D, gen):
    idx = lambda i, j: (j, 0)
    if gen == "v5e" and hasattr(pl, "Buffered"):
        try:
            # deeper weight pipeline to hide the longer per-tile DMA on v5e
            return pl.BlockSpec((tv, D), idx, pipeline_mode=pl.Buffered(3))
        except TypeError:
            pass
    return pl.BlockSpec((tv, D), idx)


# --------------------------------------------------------------------------- #
# Wrapper                                                                     #
# --------------------------------------------------------------------------- #
def pred_layer_forward(x, weight, bias, y, *, get_scores=True, tm=None, tv=None,
                       scores_dtype=jnp.bfloat16, vmem_limit_bytes=None):
    """
    x      : [N, D]  float32 / bfloat16   (flattened (batch*seq, emb_dim_decoder))
    weight : [V, D]  float32 / bfloat16 / fp8  (nn.Linear layout, NOT transposed)
    bias   : [V]
    y      : [N]     integer targets; caller asserts no pad_index entries
                     (matching the module's host-side assert — no in-kernel guard).
    get_scores=False skips the [N, V] scores store (loss-only training path).
    scores default to bfloat16 to halve the scores HBM stream; pass
    scores_dtype=jnp.float32 for full-precision scores.  The loss is always
    returned as float32 (F.cross_entropy reduces in f32).
    Returns (scores or None, loss).
    """
    N, D = x.shape
    V, D2 = weight.shape
    assert D == D2, (D, D2)

    scores_dtype = np.dtype(scores_dtype)
    x_it = np.dtype(x.dtype).itemsize
    w_it = np.dtype(weight.dtype).itemsize
    b_it = np.dtype(bias.dtype).itemsize
    s_it = scores_dtype.itemsize

    phys_vmem, gen = _device_vmem_info()
    tm_d, tv_d, align_m = _default_tiles(N, V, D, gen, x_it, w_it, s_it,
                                         get_scores, phys_vmem)
    if tm is None:
        tm = tm_d
    if tv is None:
        tv = tv_d

    assert N % tm == 0 and V % tv == 0, (N, tm, V, tv)
    assert tm == N or tm % align_m == 0, (tm, align_m)
    assert tv == V or tv % 128 == 0, (tv,)

    # Gather the target score in the wrapper when f32 scores are materialized
    # (one less pass over the logits tile); otherwise keep the f32 in-kernel
    # gather (bf16 scores would lose precision; loss-only has no scores at all).
    gather_in_kernel = (not get_scores) or (s_it < 4)

    b2 = bias.reshape(1, V)
    y2 = y.reshape(N, 1).astype(jnp.int32)

    # ---- always set an explicit VMEM budget from the tile footprint ----
    if vmem_limit_bytes is None:
        est = (2 * tm * D * x_it                 # x tile (double-buffered)
               + 2 * tv * D * w_it               # weight tile
               + 2 * tv * b_it                   # bias tile
               + (2 * tm * 4 if gather_in_kernel else 0)
               + (2 * tm * tv * s_it if get_scores else 0)
               + 2 * tm * 4                      # per-row output
               + 3 * tm * tv * 4                 # f32 logits + exp temporaries
               + 4 * tm * 4)                     # scratch accumulators
        vmem_limit_bytes = min(max(int(est * 1.25) + (4 << 20), 32 << 20),
                               int(phys_vmem * 0.8))

    # ---- specs ----
    in_specs = [
        pl.BlockSpec((tm, D), lambda i, j: (i, 0)),   # x row tile (resident over j)
        _weight_spec(tv, D, gen),                     # weight tile, [V, D] layout
        pl.BlockSpec((1, tv), lambda i, j: (0, j)),   # bias tile
    ]
    operands = [x, weight, b2]
    if gather_in_kernel:
        in_specs.append(pl.BlockSpec((tm, 1), lambda i, j: (i, 0)))
        operands.append(y2)

    loss_spec = pl.BlockSpec((tm, 1), lambda i, j: (i, 0))
    loss_shape = jax.ShapeDtypeStruct((N, 1), jnp.float32)
    if get_scores:
        out_shape = (jax.ShapeDtypeStruct((N, V), scores_dtype), loss_shape)
        out_specs = (pl.BlockSpec((tm, tv), lambda i, j: (i, j)), loss_spec)
    else:
        out_shape = loss_shape
        out_specs = loss_spec

    scratch_shapes = [pltpu.VMEM((tm, 1), jnp.float32),    # running max
                      pltpu.VMEM((tm, 1), jnp.float32)]    # running sum of exp
    if gather_in_kernel:
        scratch_shapes.append(pltpu.VMEM((tm, 1), jnp.float32))  # target score

    kernel = _make_kernel(tv, get_scores, gather_in_kernel)

    out = pl.pallas_call(
        kernel,
        out_shape=out_shape,
        grid_spec=pltpu.PrefetchScalarGridSpec(
            num_scalar_prefetch=0,
            grid=(N // tm, V // tv),
            in_specs=in_specs,
            out_specs=out_specs,
            scratch_shapes=scratch_shapes,
        ),
        compiler_params=pltpu.CompilerParams(
            dimension_semantics=("parallel", "arbitrary"),
            vmem_limit_bytes=int(vmem_limit_bytes),
        ),
    )(*operands)

    if get_scores:
        scores, row_out = out
    else:
        scores, row_out = None, out

    if gather_in_kernel:
        loss = jnp.mean(row_out[:, 0])
    else:
        tgt = jnp.take_along_axis(scores.astype(jnp.float32), y2, axis=-1)
        loss = jnp.mean(row_out[:, 0] - tgt[:, 0])
    # Keep the loss in float32 (the module's trailing .type_as(scores) is the
    # caller's choice; cross-entropy itself is reduced in f32).
    return scores, loss.astype(jnp.float32)


# --------------------------------------------------------------------------- #
# Self-test                                                                   #
# --------------------------------------------------------------------------- #
if __name__ == "__main__":
    # Module-consistent small shapes: batch=2, seq=8 -> N=16 tokens,
    # emb_dim_decoder=32, n_words=512.
    batch, seq, D, V = 2, 8, 32, 512
    N = batch * seq
    pad_index = 2

    key = jax.random.PRNGKey(0)
    kx, kw, kb, ky = jax.random.split(key, 4)

    x = jax.random.normal(kx, (N, D), dtype=jnp.float32)
    weight = jax.random.normal(kw, (V, D), dtype=jnp.float32) * (1.0 / math.sqrt(D))
    bias = jax.random.normal(kb, (V,), dtype=jnp.float32) * 0.01
    y = jax.random.randint(ky, (N,), 0, V - 1, dtype=jnp.int32)
    y = jnp.where(y == pad_index, y + 1, y)   # module asserts no pad targets

    # f32 reference
    ref_scores = x @ weight.T + bias
    ref_lse = jax.scipy.special.logsumexp(ref_scores, axis=-1)
    ref_loss = jnp.mean(ref_lse - ref_scores[jnp.arange(N), y])

    # --- 1) f32 scores, wrapper-side target gather; small tiles -> grid (2, 4) ---
    scores, loss = pred_layer_forward(x, weight, bias, y, tm=8, tv=128,
                                      scores_dtype=jnp.float32)
    jax.block_until_ready((scores, loss))
    assert loss.dtype == jnp.float32
    assert jnp.allclose(scores, ref_scores, atol=1e-4, rtol=1e-4)
    assert jnp.allclose(loss, ref_loss, atol=1e-4, rtol=1e-4)

    # --- 2) bf16 streaming path: bf16 x/W/bias, default bf16 scores,
    #        f32 MXU accumulate + f32 in-kernel target gather -> grid (1, 4) ---
    x_bf = x.astype(jnp.bfloat16)
    w_bf = weight.astype(jnp.bfloat16)
    b_bf = bias.astype(jnp.bfloat16)
    scores_bf, loss_bf = pred_layer_forward(x_bf, w_bf, b_bf, y, tm=16, tv=128)
    jax.block_until_ready((scores_bf, loss_bf))
    assert scores_bf.dtype == jnp.bfloat16 and loss_bf.dtype == jnp.float32

    ref_scores_bf = jax.lax.dot_general(
        x_bf, w_bf, dimension_numbers=(((1,), (1,)), ((), ())),
        preferred_element_type=jnp.float32) + b_bf.astype(jnp.float32)
    ref_lse_bf = jax.scipy.special.logsumexp(ref_scores_bf, axis=-1)
    ref_loss_bf = jnp.mean(ref_lse_bf - ref_scores_bf[jnp.arange(N), y])
    assert jnp.allclose(scores_bf.astype(jnp.float32), ref_scores_bf,
                        atol=1e-1, rtol=5e-2)
    assert jnp.allclose(loss_bf, ref_loss_bf, atol=1e-2, rtol=1e-2)

    # --- 3) loss-only mode (no [N, V] scores store), auto-derived tiles ---
    none_scores, loss_only = pred_layer_forward(x, weight, bias, y,
                                                get_scores=False)
    jax.block_until_ready(loss_only)
    assert none_scores is None and loss_only.dtype == jnp.float32
    assert jnp.allclose(loss_only, ref_loss, atol=1e-4, rtol=1e-4)

    print("KERNEL_OK")
</pallas_src>

<mosaic_0001>
module attributes {stable_mosaic.version = 11 : i64} {
  func.func @kernel(%arg0: i32, %arg1: i32, %arg2: memref<8x32xf32, #tpu.memory_space<vmem>>, %arg3: memref<128x32xf32, #tpu.memory_space<vmem>>, %arg4: memref<1x128xf32, #tpu.memory_space<vmem>>, %arg5: memref<8x128xf32, #tpu.memory_space<vmem>>, %arg6: memref<8x1xf32, #tpu.memory_space<vmem>>, %arg7: memref<8x1xf32, #tpu.memory_space<vmem>>, %arg8: memref<8x1xf32, #tpu.memory_space<vmem>>) attributes {dimension_semantics = [#tpu.dimension_semantics<parallel>, #tpu.dimension_semantics<arbitrary>], iteration_bounds = array<i64: 2, 4>, scalar_prefetch = 0 : i64, scratch_operands = 2 : i64, tpu.core_type = #tpu.core_type<tc>, window_params = [{transform_indices = @transform_0, window_bounds = array<i64: 8, 32>}, {transform_indices = @transform_1, window_bounds = array<i64: 128, 32>}, {transform_indices = @transform_2, window_bounds = array<i64: 1, 128>}, {transform_indices = @transform_3, window_bounds = array<i64: 8, 128>}, {transform_indices = @transform_4, window_bounds = array<i64: 8, 1>}]} {
    %c0_i32 = arith.constant 0 : i32
    %0 = arith.cmpi eq, %arg1, %c0_i32 : i32
    %1 = arith.extui %0 : i1 to i32
    %c0_i32_0 = arith.constant 0 : i32
    %2 = arith.cmpi ne, %1, %c0_i32_0 : i32
    scf.if %2 {
      %cst_19 = arith.constant 0xFF800000 : f32
      %29 = vector.broadcast %cst_19 : f32 to vector<8x1xf32>
      %c0_20 = arith.constant 0 : index
      %c0_21 = arith.constant 0 : index
      %30 = vector.load %arg7[%c0_20, %c0_21] : memref<8x1xf32, #tpu.memory_space<vmem>>, vector<8x1xf32>
      tpu.vector_store %arg7[%c0_20, %c0_21], %29 {strides = array<i32>} : memref<8x1xf32, #tpu.memory_space<vmem>>, vector<8x1xf32>,
      %cst_22 = arith.constant 0.000000e+00 : f32
      %31 = vector.broadcast %cst_22 : f32 to vector<8x1xf32>
      %c0_23 = arith.constant 0 : index
      %c0_24 = arith.constant 0 : index
      %32 = vector.load %arg8[%c0_23, %c0_24] : memref<8x1xf32, #tpu.memory_space<vmem>>, vector<8x1xf32>
      tpu.vector_store %arg8[%c0_23, %c0_24], %31 {strides = array<i32>} : memref<8x1xf32, #tpu.memory_space<vmem>>, vector<8x1xf32>,
    } else {
    }
    %c0 = arith.constant 0 : index
    %c0_1 = arith.constant 0 : index
    %3 = vector.load %arg2[%c0, %c0_1] : memref<8x32xf32, #tpu.memory_space<vmem>>, vector<8x32xf32>
    %c0_2 = arith.constant 0 : index
    %c0_3 = arith.constant 0 : index
    %4 = vector.load %arg3[%c0_2, %c0_3] : memref<128x32xf32, #tpu.memory_space<vmem>>, vector<128x32xf32>
    %cst = arith.constant dense<0.000000e+00> : vector<8x128xf32>
    %5 = tpu.matmul %3, %4, %cst {dimension_numbers = #tpu.dot_dimension_numbers<[1], [1], [0], [0], [0, 0, 1, 0], [], []>} : vector<8x32xf32>, vector<128x32xf32>, vector<8x128xf32> -> vector<8x128xf32>
    %c0_4 = arith.constant 0 : index
    %c0_5 = arith.constant 0 : index
    %6 = vector.load %arg4[%c0_4, %c0_5] : memref<1x128xf32, #tpu.memory_space<vmem>>, vector<1x128xf32>
    %7 = vector.broadcast %6 : vector<1x128xf32> to vector<8x128xf32>
    %8 = arith.addf %5, %7 : vector<8x128xf32>
    %c0_6 = arith.constant 0 : index
    %c0_7 = arith.constant 0 : index
    %9 = vector.load %arg5[%c0_6, %c0_7] : memref<8x128xf32, #tpu.memory_space<vmem>>, vector<8x128xf32>
    tpu.vector_store %arg5[%c0_6, %c0_7], %8 {strides = array<i32>} : memref<8x128xf32, #tpu.memory_space<vmem>>, vector<8x128xf32>,
    %c0_8 = arith.constant 0 : index
    %c0_9 = arith.constant 0 : index
    %10 = vector.load %arg7[%c0_8, %c0_9] : memref<8x1xf32, #tpu.memory_space<vmem>>, vector<8x1xf32>
    %cst_10 = arith.constant dense<0xFF800000> : vector<8xf32>
    %11 = vector.multi_reduction <maximumf>, %8, %cst_10 [1] : vector<8x128xf32> to vector<8xf32>
    %12 = vector.shape_cast %11 : vector<8xf32> to vector<8x1xf32>
    %13 = arith.maximumf %10, %12 : vector<8x1xf32>
    %14 = arith.subf %10, %13 : vector<8x1xf32>
    %15 = math.exp %14 : vector<8x1xf32>
    %c0_11 = arith.constant 0 : index
    %c0_12 = arith.constant 0 : index
    %16 = vector.load %arg8[%c0_11, %c0_12] : memref<8x1xf32, #tpu.memory_space<vmem>>, vector<8x1xf32>
    %17 = arith.mulf %15, %16 : vector<8x1xf32>
    %18 = vector.broadcast %13 : vector<8x1xf32> to vector<8x128xf32>
    %19 = arith.subf %8, %18 : vector<8x128xf32>
    %20 = math.exp %19 : vector<8x128xf32>
    %cst_13 = arith.constant dense<0.000000e+00> : vector<8xf32>
    %21 = vector.multi_reduction <add>, %20, %cst_13 [1] : vector<8x128xf32> to vector<8xf32>
    %22 = vector.shape_cast %21 : vector<8xf32> to vector<8x1xf32>
    %23 = arith.addf %17, %22 : vector<8x1xf32>
    %c0_14 = arith.constant 0 : index
    %c0_15 = arith.constant 0 : index
    %24 = vector.load %arg8[%c0_14, %c0_15] : memref<8x1xf32, #tpu.memory_space<vmem>>, vector<8x1xf32>
    tpu.vector_store %arg8[%c0_14, %c0_15], %23 {strides = array<i32>} : memref<8x1xf32, #tpu.memory_space<vmem>>, vector<8x1xf32>,
    %c0_16 = arith.constant 0 : index
    %c0_17 = arith.constant 0 : index
    %25 = vector.load %arg7[%c0_16, %c0_17] : memref<8x1xf32, #tpu.memory_space<vmem>>, vector<8x1xf32>
    tpu.vector_store %arg7[%c0_16, %c0_17], %13 {strides = array<i32>} : memref<8x1xf32, #tpu.memory_space<vmem>>, vector<8x1xf32>,
    %c3_i32 = arith.constant 3 : i32
    %26 = arith.cmpi eq, %arg1, %c3_i32 : i32
    %27 = arith.extui %26 : i1 to i32
    %c0_i32_18 = arith.constant 0 : i32
    %28 = arith.cmpi ne, %27, %c0_i32_18 : i32
    scf.if %28 {
      %c0_19 = arith.constant 0 : index
      %c0_20 = arith.constant 0 : index
      %29 = vector.load %arg7[%c0_19, %c0_20] : memref<8x1xf32, #tpu.memory_space<vmem>>, vector<8x1xf32>
      %c0_21 = arith.constant 0 : index
      %c0_22 = arith.constant 0 : index
      %30 = vector.load %arg8[%c0_21, %c0_22] : memref<8x1xf32, #tpu.memory_space<vmem>>, vector<8x1xf32>
      %31 = math.log %30 : vector<8x1xf32>
      %32 = arith.addf %29, %31 : vector<8x1xf32>
      %c0_23 = arith.constant 0 : index
      %c0_24 = arith.constant 0 : index
      %33 = vector.load %arg6[%c0_23, %c0_24] : memref<8x1xf32, #tpu.memory_space<vmem>>, vector<8x1xf32>
      tpu.vector_store %arg6[%c0_23, %c0_24], %32 {strides = array<i32>} : memref<8x1xf32, #tpu.memory_space<vmem>>, vector<8x1xf32>,
    } else {
    }
    return
  }
  func.func @transform_0(%arg0: i32, %arg1: i32) -> (i32, i32) {
    %c0_i32 = arith.constant 0 : i32
    %c0_i32_0 = arith.constant 0 : i32
    return %arg0, %c0_i32 : i32, i32
  }
  func.func @transform_1(%arg0: i32, %arg1: i32) -> (i32, i32) {
    %c0_i32 = arith.constant 0 : i32
    %c0_i32_0 = arith.constant 0 : i32
    return %arg1, %c0_i32 : i32, i32
  }
  func.func @transform_2(%arg0: i32, %arg1: i32) -> (i32, i32) {
    %c0_i32 = arith.constant 0 : i32
    %c0_i32_0 = arith.constant 0 : i32
    return %c0_i32, %arg1 : i32, i32
  }
  func.func @transform_3(%arg0: i32, %arg1: i32) -> (i32, i32) {
    %c0_i32 = arith.constant 0 : i32
    return %arg0, %arg1 : i32, i32
  }
  func.func @transform_4(%arg0: i32, %arg1: i32) -> (i32, i32) {
    %c0_i32 = arith.constant 0 : i32
    %c0_i32_0 = arith.constant 0 : i32
    return %arg0, %c0_i32 : i32, i32
  }
}

</mosaic_0001>

<llo_original>
// kernel: tpu_custom_call.1
$region0: #{tpu_custom_call.1}
  #allocation0 [shape = 'u32[]', space=smem, size = 0x4, offset = 0x4, fixed_abs, tag = 'smem constant byte address 0x4 - core index']
  #allocation1 [shape = 'u32[72,128]{1,0:T(1,128)}', space=vmem, size = 0x9000, scoped, tag = 'internal scratch']
  #allocation2 [shape = 'f32[8,1]{1,0:T(8,128)}', space=vmem, size = 0x1000, scoped, tag = 'scratch operand']
  #allocation3 [shape = 'f32[8,1]{1,0:T(8,128)}', space=vmem, size = 0x1000, scoped, tag = 'scratch operand']
  %s0 = inlined_call_operand.vmem [shape: f32[16,32], index: 0, kind: input, shape index: {}]
  %s1 = inlined_call_operand.vmem [shape: f32[512,32], index: 1, kind: input, shape index: {}]
  %s2 = inlined_call_operand.vmem [shape: f32[1,512], index: 2, kind: input, shape index: {}]
  %s3 = inlined_call_operand.hbm [shape: f32[16,512], index: 3, kind: output, shape index: {0}]
  %s4 = inlined_call_operand.vmem [shape: f32[16,1], index: 4, kind: output, shape index: {1}]
  %5 = xla_tuple %s3, %s4
  %s6 = sld [smem:[#allocation0]]
  $region61: #{tpu_custom_call.1} parent=0
    _
  %s8 = ssub.s32 1, %s6
  %s9 = scalar_select 0, %s8, %s6
  $region1: #{tpu_custom_call.1} parent=0
    #allocation4 [shape = 'u8[8192]{0}', space=vmem, size = 0x2000, scoped, tag = 'output window, operand 0']
    #allocation5 [shape = 's32[2]{0}', space=sflag, size = 0x8, scoped, tag = 'scoped memory for tpu_custom_call.1']
    %10 = vsyncpa [#allocation5], 0
    %s11 = scalar_lea.sflag [#allocation5], 1
    %12 = vsyncpa %s11, 0
    loop: start=0, step=1, limit=10
    $region2: #{tpu_custom_call.1} parent=1 // loop_pre_header
      _
    $region3: #{tpu_custom_call.1} parent=1 // loop_header
      %s14 = sphi 0, %s18
      %p15 = scmp.ge.s32.totalorder %s14, 10
      %s21 = sphi 0, %s33
      %s22 = sphi 0, %s29
      %s23 = sphi 0, %s21
      %s24 = sphi 0, %s22
      %s25 = sphi 0, %s23
      %s26 = sphi 0, %s24
      %s36 = sphi 0, %s38
      %s39 = sphi 0, %s36
      %s40 = sphi 0, %s39
      %s56 = sphi 0, %s40
      %s62 = sphi 0, %s64
      %s65 = sphi 0, %s62
      %s66 = sphi 0, %s65
      %s82 = sphi 0, %s66
      %s88 = sphi 0, %s90
      %s91 = sphi 0, %s88
      %s92 = sphi 0, %s91
      %s108 = sphi 0, %s92
      %s116 = sphi 0, %s118
      %s119 = sphi 0, %s116
      %s120 = sphi 0, %s119
      %s136 = sphi 0, %s120
      %s142 = sphi 0, %s144
      %s145 = sphi 0, %s142
      %s146 = sphi 0, %s145
      %s162 = sphi 0, %s146
    $region4: #{tpu_custom_call.1} parent=1 // loop_header_branch
      %17 = sbr.rel (%p15) target = $region8
    $region5: #{tpu_custom_call.1} parent=1 // loop_body
      %s19 = ssub.s32 %s14, 1
      %s20 = ssub.s32 %s14, 2
      %s27 = sadd.s32 1, %s22
      %p28 = scmp.ge.s32.totalorder %s27, 4
      %s29 = scalar_select %p28, 0, %s27
      %s30 = sadd.s32 1, %s21
      %s31 = scalar_select %p28, %s30, %s21
      %p32 = scmp.ge.s32.totalorder %s31, 2
      %s33 = scalar_select %p32, 0, %s31
      %s34 = ssub.s32 %s21, %s33
      %p35 = scmp.eq.s32.totalorder %s34, 0
      %s37 = sadd.s32 %s36, 1
      %s38 = scalar_select %p35, %s36, %s37
      %p41 = pneg %p35
      %p42 = scmp.eq.s32.totalorder %s14, 7
      %p43 = por %p41, %p42
      %p44 = scmp.ne.s32.totalorder %s36, %s39
      %p45 = scmp.eq.s32.totalorder %s14, 0
      %p46 = por %p44, %p45
      %p47 = scmp.ne.s32.totalorder %s36, %s39
      %p48 = scmp.eq.s32.totalorder %s19, 7
      %p49 = por %p47, %p48
      %p50 = scmp.ne.s32.totalorder %s39, %s40
      %p51 = scmp.eq.s32.totalorder %s19, 0
      %p52 = por %p50, %p51
      %p53 = scmp.ne.s32.totalorder %s39, %s40
      %p54 = scmp.eq.s32.totalorder %s20, 7
      %p55 = por %p53, %p54
      %p57 = scmp.ne.s32.totalorder %s40, %s56
      %p58 = scmp.eq.s32.totalorder %s20, 0
      %p59 = por %p57, %p58
      %s60 = ssub.s32 %s22, %s29
      %p61 = scmp.eq.s32.totalorder %s60, 0
      %s63 = sadd.s32 %s62, 1
      %s64 = scalar_select %p61, %s62, %s63
      %p67 = pneg %p61
      %p68 = scmp.eq.s32.totalorder %s14, 7
      %p69 = por %p67, %p68
      %p70 = scmp.ne.s32.totalorder %s62, %s65
      %p71 = scmp.eq.s32.totalorder %s14, 0
      %p72 = por %p70, %p71
      %p73 = scmp.ne.s32.totalorder %s62, %s65
      %p74 = scmp.eq.s32.totalorder %s19, 7
      %p75 = por %p73, %p74
      %p76 = scmp.ne.s32.totalorder %s65, %s66
      %p77 = scmp.eq.s32.totalorder %s19, 0
      %p78 = por %p76, %p77
      %p79 = scmp.ne.s32.totalorder %s65, %s66
      %p80 = scmp.eq.s32.totalorder %s20, 7
      %p81 = por %p79, %p80
      %p83 = scmp.ne.s32.totalorder %s66, %s82
      %p84 = scmp.eq.s32.totalorder %s20, 0
      %p85 = por %p83, %p84
      %s86 = ssub.s32 %s22, %s29
      %p87 = scmp.eq.s32.totalorder %s86, 0
      %s89 = sadd.s32 %s88, 1
      %s90 = scalar_select %p87, %s88, %s89
      %p93 = pneg %p87
      %p94 = scmp.eq.s32.totalorder %s14, 7
      %p95 = por %p93, %p94
      %p96 = scmp.ne.s32.totalorder %s88, %s91
      %p97 = scmp.eq.s32.totalorder %s14, 0
      %p98 = por %p96, %p97
      %p99 = scmp.ne.s32.totalorder %s88, %s91
      %p100 = scmp.eq.s32.totalorder %s19, 7
      %p101 = por %p99, %p100
      %p102 = scmp.ne.s32.totalorder %s91, %s92
      %p103 = scmp.eq.s32.totalorder %s19, 0
      %p104 = por %p102, %p103
      %p105 = scmp.ne.s32.totalorder %s91, %s92
      %p106 = scmp.eq.s32.totalorder %s20, 7
      %p107 = por %p105, %p106
      %p109 = scmp.ne.s32.totalorder %s92, %s108
      %p110 = scmp.eq.s32.totalorder %s20, 0
      %p111 = por %p109, %p110
      %s112 = ssub.s32 %s21, %s33
      %s113 = ssub.s32 %s22, %s29
      %s114 = sor.u32 %s112, %s113
      %p115 = scmp.eq.s32.totalorder %s114, 0
      %s117 = sadd.s32 %s116, 1
      %s118 = scalar_select %p115, %s116, %s117
      %p121 = pneg %p115
      %p122 = scmp.eq.s32.totalorder %s14, 7
      %p123 = por %p121, %p122
      %p124 = scmp.ne.s32.totalorder %s116, %s119
      %p125 = scmp.eq.s32.totalorder %s14, 0
      %p126 = por %p124, %p125
      %p127 = scmp.ne.s32.totalorder %s116, %s119
      %p128 = scmp.eq.s32.totalorder %s19, 7
      %p129 = por %p127, %p128
      %p130 = scmp.ne.s32.totalorder %s119, %s120
      %p131 = scmp.eq.s32.totalorder %s19, 0
      %p132 = por %p130, %p131
      %p133 = scmp.ne.s32.totalorder %s119, %s120
      %p134 = scmp.eq.s32.totalorder %s20, 7
      %p135 = por %p133, %p134
      %p137 = scmp.ne.s32.totalorder %s120, %s136
      %p138 = scmp.eq.s32.totalorder %s20, 0
      %p139 = por %p137, %p138
      %s140 = ssub.s32 %s21, %s33
      %p141 = scmp.eq.s32.totalorder %s140, 0
      %s143 = sadd.s32 %s142, 1
      %s144 = scalar_select %p141, %s142, %s143
      %p147 = pneg %p141
      %p148 = scmp.eq.s32.totalorder %s14, 7
      %p149 = por %p147, %p148
      %p150 = scmp.ne.s32.totalorder %s142, %s145
      %p151 = scmp.eq.s32.totalorder %s14, 0
      %p152 = por %p150, %p151
      %p153 = scmp.ne.s32.totalorder %s142, %s145
      %p154 = scmp.eq.s32.totalorder %s19, 7
      %p155 = por %p153, %p154
      %p156 = scmp.ne.s32.totalorder %s145, %s146
      %p157 = scmp.eq.s32.totalorder %s19, 0
      %p158 = por %p156, %p157
      %p159 = scmp.ne.s32.totalorder %s145, %s146
      %p160 = scmp.eq.s32.totalorder %s20, 7
      %p161 = por %p159, %p160
      %p163 = scmp.ne.s32.totalorder %s146, %s162
      %p164 = scmp.eq.s32.totalorder %s20, 0
      %p165 = por %p163, %p164
      %p166 = scmp.le.s32.totalorder 1, %s14
      %p167 = scmp.lt.s32.totalorder %s14, 9
      %p168 = pnand %p166, %p167
      %p169 = pneg %p168
      // Predicated region
      $region9: #{tpu_custom_call.1} parent=5 // pred_check
        _
      $region10: #{tpu_custom_call.1} parent=5 // pred_check_branch
        %171 = sbr.rel (%p168) target = $region12
      $region11: #{tpu_custom_call.1} parent=5 // pred_region
        %s172 = ssub.s32 %s14, 1
      $region12: #{tpu_custom_call.1} parent=5 // pred_fallthru
        _
      %p173 = scmp.lt.s32.totalorder %s14, 8
      // Predicated region
      $region13: #{tpu_custom_call.1} parent=5 // pred_check
        %p174 = pneg %p173
      $region14: #{tpu_custom_call.1} parent=5 // pred_check_branch
        %176 = sbr.rel (%p174) target = $region16
      $region15: #{tpu_custom_call.1} parent=5 // pred_region
        // Predicated region
        $region17: #{tpu_custom_call.1} parent=15 // pred_check
          %p177 = pneg %p46
        $region18: #{tpu_custom_call.1} parent=15 // pred_check_branch
          %179 = sbr.rel (%p177) target = $region20
        $region19: #{tpu_custom_call.1} parent=15 // pred_region
          %p180 = scmp.lt.s32.totalorder %s21, 1
          %s181 = scalar_select %p180, %s21, 1
          %s182 = smul.addr %s181, 8
          %s183 = scalar_lea.vmem %s0, %s182
        $region20: #{tpu_custom_call.1} parent=15 // pred_fallthru
          _
        // Predicated region
        $region21: #{tpu_custom_call.1} parent=15 // pred_check
          %p184 = pneg %p72
        $region22: #{tpu_custom_call.1} parent=15 // pred_check_branch
          %186 = sbr.rel (%p184) target = $region24
        $region23: #{tpu_custom_call.1} parent=15 // pred_region
          %s187 = smul.u32 16, %s22
          %p188 = scmp.lt.s32.totalorder %s187, 63
          %s189 = scalar_select %p188, %s187, 63
          %s190 = smul.addr %s189, 8
          %s191 = scalar_lea.vmem %s1, %s190
          %s192 = smul.u32 16, %s22
        $region24: #{tpu_custom_call.1} parent=15 // pred_fallthru
          _
        // Predicated region
        $region25: #{tpu_custom_call.1} parent=15 // pred_check
          %p193 = pneg %p98
        $region26: #{tpu_custom_call.1} parent=15 // pred_check_branch
          %195 = sbr.rel (%p193) target = $region28
        $region27: #{tpu_custom_call.1} parent=15 // pred_region
          %p196 = scmp.lt.s32.totalorder %s22, 3
          %s197 = scalar_select %p196, %s22, 3
          %s198 = scalar_lea.vmem %s2, %s197
        $region28: #{tpu_custom_call.1} parent=15 // pred_fallthru
          _
      $region16: #{tpu_custom_call.1} parent=5 // pred_fallthru
        _
      %p199 = scmp.le.s32.totalorder 1, %s14
      %p200 = scmp.lt.s32.totalorder %s14, 9
      %p201 = pnand %p199, %p200
      %p202 = pneg %p201
      // Predicated region
      $region29: #{tpu_custom_call.1} parent=5 // pred_check
        _
      $region30: #{tpu_custom_call.1} parent=5 // pred_check_branch
        %204 = sbr.rel (%p201) target = $region32
      $region31: #{tpu_custom_call.1} parent=5 // pred_region
        %s205 = ssub.s32 %s14, 1
        %p206 = scmp.lt.s32.totalorder %s23, 1
        %s207 = scalar_select %p206, %s23, 1
        %s208 = smul.addr %s207, 8
        %s209 = scalar_lea.vmem %s0, %s208
        %p210 = pneg %p52
        %p211 = pneg %p49
        %s212 = smul.u32 16, %s24
        %p213 = scmp.lt.s32.totalorder %s212, 63
        %s214 = scalar_select %p213, %s212, 63
        %s215 = smul.addr %s214, 8
        %s216 = scalar_lea.vmem %s1, %s215
        %p217 = pneg %p78
        %p218 = pneg %p75
        %p219 = scmp.lt.s32.totalorder %s24, 3
        %s220 = scalar_select %p219, %s24, 3
        %s221 = scalar_lea.vmem %s2, %s220
        %p222 = pneg %p104
        %p223 = pneg %p101
        %p224 = pneg %p132
        %p225 = pneg %p129
        %s226 = sand.u32 %s119, 1
        %s227 = scalar_lea.sflag [#allocation5], %s226
        %s228 = sand.u32 %s119, 1
        %s229 = smul.addr %s228, 8
        %s230 = scalar_lea.vmem [#allocation4], %s229
        %p231 = pneg %p158
        %p232 = pneg %p155
        %p233 = scmp.lt.s32.totalorder %s23, 1
        %s234 = scalar_select %p233, %s23, 1
        %s235 = smul.addr %s234, 8
        %s236 = scalar_lea.vmem %s4, %s235
        %p237 = scmp.lt.s32.totalorder %s23, 1
        %s238 = scalar_select %p237, %s23, 1
        %s239 = smul.addr %s238, 8
        %s240 = scalar_lea.vmem %s0, %s239
        %s241 = smul.u32 16, %s24
        %p242 = scmp.lt.s32.totalorder %s241, 63
        %s243 = scalar_select %p242, %s241, 63
        %s244 = smul.addr %s243, 8
        %s245 = scalar_lea.vmem %s1, %s244
        %s246 = smul.u32 16, %s24
        %p247 = scmp.lt.s32.totalorder %s24, 3
        %s248 = scalar_select %p247, %s24, 3
        %s249 = scalar_lea.vmem %s2, %s248
        %p250 = scmp.lt.s32.totalorder %s23, 1
        %s251 = scalar_select %p250, %s23, 1
        %s252 = smul.addr %s251, 8
        %s253 = scalar_lea.vmem %s4, %s252
        %p254 = scmp.eq.s32.totalorder %s24, 0
        // Predicated region
        $region33: #{tpu_custom_call.1} parent=31 // pred_check
          %p255 = pneg %p254
        $region34: #{tpu_custom_call.1} parent=31 // pred_check_branch
          %257 = sbr.rel (%p255) target = $region36
        $region35: #{tpu_custom_call.1} parent=31 // pred_region
          %vm258 = vcmask 7168
          %259 = vst.msk [vmem:[#allocation2] sm:$0xff] %vm258, -inf
          %260 = vst.msk [vmem:[#allocation3] sm:$0xff] %vm258, 0.0
        $region36: #{tpu_custom_call.1} parent=31 // pred_fallthru
          _
        %v261 = vld [vmem:[%s240] sm:$0xff]
        %v262 = vld [vmem:[%s245] sm:$0xff]
        %v263 = vld [vmem:[%s245 + $0x8] sm:$0xff]
        %v264 = vld [vmem:[%s245 + $0x10] sm:$0xff]
        %v265 = vld [vmem:[%s245 + $0x18] sm:$0xff]
        %v266 = vld [vmem:[%s245 + $0x20] sm:$0xff]
        %v267 = vld [vmem:[%s245 + $0x28] sm:$0xff]
        %v268 = vld [vmem:[%s245 + $0x30] sm:$0xff]
        %v269 = vld [vmem:[%s245 + $0x38] sm:$0xff]
        %v270 = vld [vmem:[%s245 + $0x40] sm:$0xff]
        %v271 = vld [vmem:[%s245 + $0x48] sm:$0xff]
        %v272 = vld [vmem:[%s245 + $0x50] sm:$0xff]
        %v273 = vld [vmem:[%s245 + $0x58] sm:$0xff]
        %v274 = vld [vmem:[%s245 + $0x60] sm:$0xff]
        %v275 = vld [vmem:[%s245 + $0x68] sm:$0xff]
        %v276 = vld [vmem:[%s245 + $0x70] sm:$0xff]
        %v277 = vld [vmem:[%s245 + $0x78] sm:$0xff]
        %v278 = vld [vmem:[%s249] sm:$0x1]
        %v280 = vperm.slane %v278, 0
        %vm282 = vcmask 261120
        %v284 = vsel %vm282, %v261, 0
        %v287 = vsel %vm282, %v262, 0
        %v290 = vsel %vm282, %v263, 0
        %v293 = vsel %vm282, %v264, 0
        %v296 = vsel %vm282, %v265, 0
        %v299 = vsel %vm282, %v266, 0
        %v302 = vsel %vm282, %v267, 0
        %v305 = vsel %vm282, %v268, 0
        %v308 = vsel %vm282, %v269, 0
        %v311 = vsel %vm282, %v270, 0
        %v314 = vsel %vm282, %v271, 0
        %v317 = vsel %vm282, %v272, 0
        %v320 = vsel %vm282, %v273, 0
        %v323 = vsel %vm282, %v274, 0
        %v326 = vsel %vm282, %v275, 0
        %v329 = vsel %vm282, %v276, 0
        %v332 = vsel %vm282, %v277, 0
        %334 = vmatpush.xpose.msra.mxu0 %v332
        %335 = vmatpush.xpose.msra.mxu0 %v329
        %336 = vmatpush.xpose.msra.mxu0 %v326
        %337 = vmatpush.xpose.msra.mxu0 %v323
        %338 = vmatpush.xpose.msra.mxu0 %v320
        %339 = vmatpush.xpose.msra.mxu0 %v317
        %340 = vmatpush.xpose.msra.mxu0 %v314
        %341 = vmatpush.xpose.msra.mxu0 %v311
        %342 = vmatpush.xpose.msra.mxu0 %v308
        %343 = vmatpush.xpose.msra.mxu0 %v305
        %344 = vmatpush.xpose.msra.mxu0 %v302
        %345 = vmatpush.xpose.msra.mxu0 %v299
        %346 = vmatpush.xpose.msra.mxu0 %v296
        %347 = vmatpush.xpose.msra.mxu0 %v293
        %348 = vmatpush.xpose.msra.mxu0 %v290
        %349 = vmatpush.xpose.msra.mxu0 %v287
        %350 = vmatmul.f32.gmra.mxu0 %v284
        %v351 = vpop.f32.mrf.mxu0
        %v352 = vadd.f32 %v280, %v351
        %353 = vdwg.mxu0
        %354 = vst [vmem:[%s230] sm:$0xff] %v352
        %v355 = vld [vmem:[#allocation2] sm:$0xff]
        %356 = vmax.xlane.f32.xlu0 %v352
        %v357 = vpop.xlane.xlu0 %356
        %v358 = vmax.f32 %v355, %v357
        %v359 = vsub.f32 %v355, %v358
        %v360 = vmul.f32 %v359, 1.442695
        %v361 = vpow.pop %v360
        %v362 = vld [vmem:[#allocation3] sm:$0xff]
        %v363 = vmul.f32 %v361, %v362
        %365 = vset.pattern.permute.xlu0 0
        %366 = vperm.xlu0 %365, %v358
        %v367 = vpop.permute.xlu0 %366
        %v369 = vsub.f32 %v352, %v367
        %v370 = vmul.f32 %v369, 1.442695
        %v371 = vpow.pop %v370
        %372 = vadd.xlane.f32.xlu0 %v371
        %v373 = vpop.xlane.xlu0 %372
        %v374 = vadd.f32 %v363, %v373
        %vm375 = vcmask 7168
        %376 = vst.msk [vmem:[#allocation3] sm:$0xff] %vm375, %v374
        %377 = vst.msk [vmem:[#allocation2] sm:$0xff] %vm375, %v358
        %p378 = scmp.eq.s32.totalorder %s24, 3
        // Predicated region
        $region37: #{tpu_custom_call.1} parent=31 // pred_check
          %p379 = pneg %p378
        $region38: #{tpu_custom_call.1} parent=31 // pred_check_branch
          %381 = sbr.rel (%p379) target = $region40
        $region39: #{tpu_custom_call.1} parent=31 // pred_region
          %v382 = vld [vmem:[#allocation2] sm:$0xff]
          %v383 = vld [vmem:[#allocation3] sm:$0xff]
          %v384 = vlog2.pop %v383
          %v385 = vmul.f32 %v384, 0.6931472
          %v386 = vadd.f32 %v382, %v385
          %387 = vst.msk [vmem:[%s253] sm:$0xff] %vm375, %v386
        $region40: #{tpu_custom_call.1} parent=31 // pred_fallthru
          _
        %s388 = sand.u32 %s119, 1
        %s389 = scalar_lea.sflag [#allocation5], %s388
        %s390 = sand.u32 %s119, 1
        %s391 = smul.addr %s390, 8
        %s392 = scalar_lea.vmem [#allocation4], %s391
        %p393 = scmp.lt.s32.totalorder %s23, 1
        %s394 = scalar_select %p393, %s23, 1
        %s395 = smul.addr %s394, 8
        %s396 = scalar_lea.vmem %s4, %s395
        // Predicated region
        $region41: #{tpu_custom_call.1} parent=31 // pred_check
          %p397 = pneg %p129
        $region42: #{tpu_custom_call.1} parent=31 // pred_check_branch
          %399 = sbr.rel (%p397) target = $region44
        $region43: #{tpu_custom_call.1} parent=31 // pred_region
          %401 = vsyncadd %s389, 0
          %s402 = smul.addr %s23, 4
          %s403 = sadd.s32 %s24, %s402
          %s404 = smul.addr %s403, 8
          %s405 = scalar_lea.hbm %s3, %s404
          %s407 = sshll.u32 %s392, 4
          %s408 = int_to_ptr.vmem [resolvable:$true] %s407
          %s409 = sshll.u32 %s405, 4
          %s410 = int_to_ptr.hbm [resolvable:$true] %s409
          %412 = dma.vmem_to_hbm [thread:$0]  %s408, 128, %s410, %s389
        $region44: #{tpu_custom_call.1} parent=31 // pred_fallthru
          _
        // Predicated region
        $region45: #{tpu_custom_call.1} parent=31 // pred_check
          %p413 = pneg %p155
        $region46: #{tpu_custom_call.1} parent=31 // pred_check_branch
          %415 = sbr.rel (%p413) target = $region48
        $region47: #{tpu_custom_call.1} parent=31 // pred_region
          _
        $region48: #{tpu_custom_call.1} parent=31 // pred_fallthru
          _
      $region32: #{tpu_custom_call.1} parent=5 // pred_fallthru
        _
      %p416 = scmp.le.s32.totalorder 2, %s14
      // Predicated region
      $region49: #{tpu_custom_call.1} parent=5 // pred_check
        %p417 = pneg %p416
      $region50: #{tpu_custom_call.1} parent=5 // pred_check_branch
        %419 = sbr.rel (%p417) target = $region52
      $region51: #{tpu_custom_call.1} parent=5 // pred_region
        %s420 = ssub.s32 %s14, 2
        // Predicated region
        $region53: #{tpu_custom_call.1} parent=51 // pred_check
          %p421 = pneg %p135
        $region54: #{tpu_custom_call.1} parent=51 // pred_check_branch
          %423 = sbr.rel (%p421) target = $region56
        $region55: #{tpu_custom_call.1} parent=51 // pred_region
          %s424 = sand.u32 %s120, 1
          %s425 = scalar_lea.sflag [#allocation5], %s424
          %s426 = sand.u32 %s120, 1
          %s427 = smul.addr %s426, 8
          %s428 = scalar_lea.vmem [#allocation4], %s427
          %430 = dma.done %s425, 128
        $region56: #{tpu_custom_call.1} parent=51 // pred_fallthru
          _
        // Predicated region
        $region57: #{tpu_custom_call.1} parent=51 // pred_check
          %p431 = pneg %p161
        $region58: #{tpu_custom_call.1} parent=51 // pred_check_branch
          %433 = sbr.rel (%p431) target = $region60
        $region59: #{tpu_custom_call.1} parent=51 // pred_region
          %p434 = scmp.lt.s32.totalorder %s25, 1
          %s435 = scalar_select %p434, %s25, 1
          %s436 = smul.addr %s435, 8
          %s437 = scalar_lea.vmem %s4, %s436
        $region60: #{tpu_custom_call.1} parent=51 // pred_fallthru
          _
      $region52: #{tpu_custom_call.1} parent=5 // pred_fallthru
        _
    $region6: #{tpu_custom_call.1} parent=1 // loop_footer
      %s18 = sadd.s32 1, %s14
    $region7: #{tpu_custom_call.1} parent=1 // loop_footer_branch
      %13 = sbr.rel target = $region3
    $region8: #{tpu_custom_call.1} parent=1 // loop_exit
      _
    %438 = vsyncpa [#allocation5], 1
    %s439 = scalar_lea.sflag [#allocation5], 1
    %440 = vsyncpa %s439, 1

</llo_original>
